<compile_context>
chip_gen: v5e
topology: v5e:2x2
jax: 0.10.0
libtpu: 0.0.40
codegen_flags: <defaults>
</compile_context>

<pallas_src>
import functools

import jax
import jax.numpy as jnp
from jax.experimental import pallas as pl
from jax.experimental.pallas import tpu as pltpu

ALPHA = 0.5
GAMMA = 2
IGNORE_INDEX = -100

# Block sizing: large lane-dense blocks amortize the ~0.35 us per-grid-step
# cost; sized against an explicit padded-VMEM budget.
TARGET_BLOCK_BYTES = 8 * 1024 * 1024     # desired logits bytes per block
VMEM_BUDGET_BYTES = 32 * 1024 * 1024     # soft cap on padded VMEM working set
HARD_VMEM_CAP_BYTES = 48 * 1024 * 1024   # hard cap (v7x has 64 MiB physical)
MAX_TILE_S = 512 * 1024                  # cap on spatial lanes per block
TILE_S_FLOOR = 512                       # keep each strided-DMA row >= 2 KiB
MAX_TILE_M = 8 * 1024                    # cap on rows per block (2-D path)


def _round_up(x, m):
    return ((x + m - 1) // m) * m


def _sublane_tile(itemsize):
    # Sublane tile height for a dtype: f32 -> 8, bf16 -> 16, int8/fp8 -> 32.
    return 8 * max(1, 4 // itemsize)


# ---------------------------------------------------------------------------
# N-D (NCHW-style) path: (N, C, S) with S lane-dense.
# ---------------------------------------------------------------------------
def _focal_ce_nchw_kernel(preds_ref, labels_ref, sum_ref, cnt_ref, *,
                          total_s, tile_s, grid_s_inner, fold, need_mask):
    """Accumulate per-lane CE sums and valid counts for one parallel chunk.

    preds_ref:  (1, C, TILE_S) logits block (native dtype; cast in-kernel)
    labels_ref: (1, 1, TILE_S) int32 labels block
    sum_ref:    (1, 1, TILE_S) f32 per-lane CE partial sums (resident acc.)
    cnt_ref:    (1, 1, TILE_S) f32 per-lane valid-count partials (resident acc.)
    """
    j = pl.program_id(1)

    @pl.when(j == 0)
    def _init():
        sum_ref[...] = jnp.zeros_like(sum_ref)
        cnt_ref[...] = jnp.zeros_like(cnt_ref)

    logits = preds_ref[...].astype(jnp.float32)           # (1, C, TS)
    labels = labels_ref[...]                                # (1, 1, TS) int32
    _, c, ts = logits.shape

    # One-hot select of the target logit via iota-compare over the class
    # (sublane) axis -- no gather needed.
    class_ids = jax.lax.broadcasted_iota(jnp.int32, (1, c, ts), 1)
    onehot = class_ids == labels                            # (1, C, TS)

    # Numerically-stable log-sum-exp over the class (sublane) axis.
    row_max = jnp.max(logits, axis=1, keepdims=True)        # (1, 1, TS)
    lse = jnp.log(jnp.sum(jnp.exp(logits - row_max), axis=1,
                          keepdims=True)) + row_max
    tgt = jnp.sum(jnp.where(onehot, logits, 0.0), axis=1, keepdims=True)
    ce = lse - tgt                                          # (1, 1, TS)

    valid = labels != IGNORE_INDEX                          # (1, 1, TS)
    if need_mask:
        # Only emitted when the spatial extent is not covered exactly
        # (tail block and/or odd fold split); statically elided otherwise.
        if fold > 1:
            chunk = pl.program_id(0) % fold
            start = (chunk * grid_s_inner + j) * tile_s
        else:
            start = j * tile_s
        col_ids = jax.lax.broadcasted_iota(jnp.int32, (1, 1, ts), 2)
        valid = valid & ((start + col_ids) < total_s)

    # Pure per-lane VPU adds into the lane-dense resident accumulators.
    sum_ref[...] += jnp.where(valid, ce, 0.0)
    cnt_ref[...] += valid.astype(jnp.float32)


def _mean_ce_nchw(preds, labels, tile_s):
    """Mean CE (ignore_index aware) for (N, C, d1, ..., dk) logits."""
    n, c = preds.shape[0], preds.shape[1]
    s = 1
    for d in preds.shape[2:]:
        s *= d
    logits = preds.reshape(n, c, s)          # free: row-major metadata reshape
    lab = labels.reshape(n, 1, s).astype(jnp.int32)

    itemsize = jnp.dtype(logits.dtype).itemsize
    padded_c = _round_up(c, _sublane_tile(itemsize))
    # Per-lane *padded* VMEM bytes: double-buffered logits + labels (int32,
    # 1 -> 8 sublanes) + the two f32 partial accumulators (1 -> 8 sublanes).
    per_lane = 2 * padded_c * itemsize + 2 * 8 * 4 + 2 * 2 * 8 * 4

    if tile_s is None:
        tile_s = min(TARGET_BLOCK_BYTES // (padded_c * itemsize),
                     VMEM_BUDGET_BYTES // max(per_lane, 1),
                     MAX_TILE_S)
        tile_s = max(TILE_S_FLOOR, (tile_s // 128) * 128)
        hard_tile = max(128, (HARD_VMEM_CAP_BYTES // per_lane) // 128 * 128)
        tile_s = min(tile_s, hard_tile)
        if tile_s >= s:
            tile_s = s                        # single block == full spatial dim
    grid_s = pl.cdiv(s, tile_s)

    # Fold two spatial chunks into the parallel axis when there is only one
    # batch element, so v7x's two TensorCores both get work (free on v5e/v6e).
    fold = 2 if (n == 1 and grid_s >= 2) else 1
    grid_s_inner = pl.cdiv(grid_s, fold)
    grid = (n * fold, grid_s_inner)
    need_mask = (fold * grid_s_inner * tile_s) != s

    if fold == 1:
        logits_map = lambda i, j: (i, 0, j)
        labels_map = lambda i, j: (i, 0, j)
    else:
        exact_split = (fold * grid_s_inner) == grid_s

        def _sblock(i, j):
            sb = (i % fold) * grid_s_inner + j
            if exact_split:
                return sb
            # Padded fold blocks past the real spatial range: clamp the block
            # index (the in-kernel bounds mask zeroes their contribution).
            return jnp.minimum(sb, grid_s - 1)

        logits_map = lambda i, j: (i // fold, 0, _sblock(i, j))
        labels_map = lambda i, j: (i // fold, 0, _sblock(i, j))

    kernel = functools.partial(
        _focal_ce_nchw_kernel, total_s=s, tile_s=tile_s,
        grid_s_inner=grid_s_inner, fold=fold, need_mask=need_mask)

    footprint = _round_up(tile_s, 128) * per_lane
    vmem_limit = int(min(HARD_VMEM_CAP_BYTES + 8 * 1024 * 1024,
                         max(footprint + 8 * 1024 * 1024, 16 * 1024 * 1024)))

    sum_p, cnt_p = pl.pallas_call(
        kernel,
        out_shape=(
            jax.ShapeDtypeStruct((n * fold, 1, tile_s), jnp.float32),
            jax.ShapeDtypeStruct((n * fold, 1, tile_s), jnp.float32),
        ),
        grid_spec=pltpu.PrefetchScalarGridSpec(
            num_scalar_prefetch=0,
            grid=grid,
            in_specs=[
                pl.BlockSpec((1, c, tile_s), logits_map),
                pl.BlockSpec((1, 1, tile_s), labels_map),
            ],
            out_specs=[
                pl.BlockSpec((1, 1, tile_s), lambda i, j: (i, 0, 0)),
                pl.BlockSpec((1, 1, tile_s), lambda i, j: (i, 0, 0)),
            ],
        ),
        compiler_params=pltpu.CompilerParams(
            # batch/fold axis sharded across TensorCores (v7x megacore);
            # spatial axis is the accumulation (reduction) axis.
            dimension_semantics=("parallel", "arbitrary"),
            vmem_limit_bytes=vmem_limit,
        ),
    )(logits, lab)

    # Tiny tree reduction over the lane-dense partials.
    return jnp.sum(sum_p) / jnp.sum(cnt_p)


# ---------------------------------------------------------------------------
# 2-D (M, C) path: rows on sublanes, classes on lanes; no HBM transpose.
# ---------------------------------------------------------------------------
def _focal_ce_2d_kernel(preds_ref, labels_ref, sum_ref, cnt_ref, *,
                        total_m, tile_m, need_mask):
    logits = preds_ref[...].astype(jnp.float32)             # (TM, C)
    labels = labels_ref[...]                                  # (TM, 1) int32
    tm, c = logits.shape

    class_ids = jax.lax.broadcasted_iota(jnp.int32, (tm, c), 1)
    onehot = class_ids == labels                              # (TM, C)

    row_max = jnp.max(logits, axis=1, keepdims=True)          # (TM, 1)
    lse = jnp.log(jnp.sum(jnp.exp(logits - row_max), axis=1,
                          keepdims=True)) + row_max
    tgt = jnp.sum(jnp.where(onehot, logits, 0.0), axis=1, keepdims=True)
    ce = lse - tgt                                            # (TM, 1)

    valid = labels != IGNORE_INDEX
    if need_mask:
        row_ids = jax.lax.broadcasted_iota(jnp.int32, (tm, 1), 0)
        valid = valid & ((pl.program_id(0) * tile_m + row_ids) < total_m)

    sum_ref[...] = jnp.where(valid, ce, 0.0)
    cnt_ref[...] = valid.astype(jnp.float32)


def _mean_ce_2d(preds, labels, tile_m):
    """Mean CE (ignore_index aware) for (M, C) logits, native layout."""
    m, c = preds.shape
    lab = labels.reshape(m, 1).astype(jnp.int32)

    itemsize = jnp.dtype(preds.dtype).itemsize
    padded_c = _round_up(c, 128)          # lane padding of one logits row
    # Per-row padded VMEM bytes: double-buffered logits rows + labels and the
    # two per-row outputs (each (.,1) padded to a 128-lane word row).
    per_row = 2 * padded_c * itemsize + 2 * 128 * 4 + 2 * 2 * 128 * 4

    if tile_m is None:
        tile_m = min(TARGET_BLOCK_BYTES // (padded_c * itemsize),
                     VMEM_BUDGET_BYTES // max(per_row, 1),
                     MAX_TILE_M)
        tile_m = max(8, (tile_m // 8) * 8)
        if tile_m >= m:
            tile_m = m
    grid_m = pl.cdiv(m, tile_m)
    need_mask = (grid_m * tile_m) != m

    kernel = functools.partial(_focal_ce_2d_kernel, total_m=m,
                               tile_m=tile_m, need_mask=need_mask)

    footprint = _round_up(tile_m, 8) * per_row
    vmem_limit = int(min(HARD_VMEM_CAP_BYTES + 8 * 1024 * 1024,
                         max(footprint + 8 * 1024 * 1024, 16 * 1024 * 1024)))

    sum_p, cnt_p = pl.pallas_call(
        kernel,
        out_shape=(
            jax.ShapeDtypeStruct((grid_m * tile_m, 1), jnp.float32),
            jax.ShapeDtypeStruct((grid_m * tile_m, 1), jnp.float32),
        ),
        grid_spec=pltpu.PrefetchScalarGridSpec(
            num_scalar_prefetch=0,
            grid=(grid_m,),
            in_specs=[
                pl.BlockSpec((tile_m, c), lambda i: (i, 0)),
                pl.BlockSpec((tile_m, 1), lambda i: (i, 0)),
            ],
            out_specs=[
                pl.BlockSpec((tile_m, 1), lambda i: (i, 0)),
                pl.BlockSpec((tile_m, 1), lambda i: (i, 0)),
            ],
        ),
        compiler_params=pltpu.CompilerParams(
            dimension_semantics=("parallel",),   # fully independent blocks
            vmem_limit_bytes=vmem_limit,
        ),
    )(preds, lab)

    return jnp.sum(sum_p) / jnp.sum(cnt_p)


# ---------------------------------------------------------------------------
# Public entry point: FocalLoss_v2.forward
# ---------------------------------------------------------------------------
@functools.partial(jax.jit, static_argnames=("tile_s", "tile_m"))
def focal_loss_v2(preds, labels, tile_s=None, tile_m=None):
    """Pallas implementation of FocalLoss_v2.forward.

    preds:  (N, C, d1, ..., dk) float logits (PyTorch NCHW-style) or (M, C).
    labels: matching integer class ids (ignore_index = -100).
    Returns a scalar float32 loss.
    """
    if preds.ndim >= 3:
        ce_mean = _mean_ce_nchw(preds, labels, tile_s)
    elif preds.ndim == 2:
        ce_mean = _mean_ce_2d(preds, labels, tile_m)
    else:
        raise ValueError("preds must be (M, C) or (N, C, d1, ..., dk)")

    # Focal transform on the scalar mean CE (exactly what the module does).
    logpt = -ce_mean
    pt = jnp.exp(logpt)
    return -((1.0 - pt) ** GAMMA) * ALPHA * logpt


# ---------------------------------------------------------------------------
# Plain-JAX reference matching the PyTorch module semantics.
# ---------------------------------------------------------------------------
def _reference_focal_loss(preds, labels):
    c = preds.shape[1]
    if preds.ndim >= 3:
        perm = (0,) + tuple(range(2, preds.ndim)) + (1,)
        logits = jnp.transpose(preds, perm).reshape(-1, c).astype(jnp.float32)
    else:
        logits = preds.astype(jnp.float32)
    lab = labels.reshape(-1)
    valid = lab != IGNORE_INDEX
    lab_safe = jnp.where(valid, lab, 0)
    logz = jax.nn.logsumexp(logits, axis=-1)
    tgt = jnp.take_along_axis(logits, lab_safe[:, None], axis=-1)[:, 0]
    ce = logz - tgt
    ce_mean = jnp.sum(jnp.where(valid, ce, 0.0)) / jnp.sum(valid.astype(jnp.float32))
    logpt = -ce_mean
    pt = jnp.exp(logpt)
    return -((1.0 - pt) ** GAMMA) * ALPHA * logpt


if __name__ == "__main__":
    key = jax.random.PRNGKey(0)
    k1, k2, k3, k4, k5, k6, k7, k8 = jax.random.split(key, 8)

    # Main small test: (2, 4, 16, 16) NCHW logits; single spatial block,
    # tail mask statically elided.
    N, C, H, W = 2, 4, 16, 16
    preds = jax.random.normal(k1, (N, C, H, W), dtype=jnp.float32)
    labels = jax.random.randint(k2, (N, H, W), 0, C, dtype=jnp.int32)
    labels = labels.at[0, 0, :4].set(IGNORE_INDEX)   # exercise the ignore mask

    loss = focal_loss_v2(preds, labels)
    jax.block_until_ready(loss)
    ref = _reference_focal_loss(preds, labels)
    assert jnp.allclose(loss, ref, rtol=1e-5, atol=1e-6), (loss, ref)

    # Multi-step spatial grid with a masked tail block
    # (S = 2304, tile_s = 1024 -> 3 grid steps, 768 OOB lanes masked).
    N2, C2, H2, W2 = 2, 4, 48, 48
    preds2 = jax.random.normal(k3, (N2, C2, H2, W2), dtype=jnp.float32)
    labels2 = jax.random.randint(k4, (N2, H2, W2), 0, C2, dtype=jnp.int32)
    labels2 = labels2.at[1, 3, :7].set(IGNORE_INDEX)

    loss2 = focal_loss_v2(preds2, labels2, tile_s=1024)
    jax.block_until_ready(loss2)
    ref2 = _reference_focal_loss(preds2, labels2)
    assert jnp.allclose(loss2, ref2, rtol=1e-5, atol=1e-6), (loss2, ref2)

    # Batch-1 input: exercises the fold=2 megacore split of the spatial axis
    # (S = 2304, tile_s = 512 -> 5 spatial blocks folded into a (2, 3) grid
    # with one clamped, fully-masked padding block).
    N3, C3, H3, W3 = 1, 4, 48, 48
    preds3 = jax.random.normal(k5, (N3, C3, H3, W3), dtype=jnp.float32)
    labels3 = jax.random.randint(k6, (N3, H3, W3), 0, C3, dtype=jnp.int32)
    labels3 = labels3.at[0, 0, :5].set(IGNORE_INDEX)

    loss3 = focal_loss_v2(preds3, labels3, tile_s=512)
    jax.block_until_ready(loss3)
    ref3 = _reference_focal_loss(preds3, labels3)
    assert jnp.allclose(loss3, ref3, rtol=1e-5, atol=1e-6), (loss3, ref3)

    # Native 2-D (M, C) path (no materialized transpose): M = 1000, C = 10,
    # tile_m = 256 -> 4 row blocks with a masked tail.
    M4, C4 = 1000, 10
    preds4 = jax.random.normal(k7, (M4, C4), dtype=jnp.float32)
    labels4 = jax.random.randint(k8, (M4,), 0, C4, dtype=jnp.int32)
    labels4 = labels4.at[:13].set(IGNORE_INDEX)

    loss4 = focal_loss_v2(preds4, labels4, tile_m=256)
    jax.block_until_ready(loss4)
    ref4 = _reference_focal_loss(preds4, labels4)
    assert jnp.allclose(loss4, ref4, rtol=1e-5, atol=1e-6), (loss4, ref4)

    print("KERNEL_OK")
</pallas_src>

<mosaic_0001>
module attributes {stable_mosaic.version = 11 : i64} {
  func.func @_focal_ce_nchw_kernel(%arg0: i32, %arg1: i32, %arg2: memref<1x4x256xf32, #tpu.memory_space<vmem>>, %arg3: memref<1x1x256xi32, #tpu.memory_space<vmem>>, %arg4: memref<1x1x256xf32, #tpu.memory_space<vmem>>, %arg5: memref<1x1x256xf32, #tpu.memory_space<vmem>>) attributes {dimension_semantics = [#tpu.dimension_semantics<parallel>, #tpu.dimension_semantics<arbitrary>], iteration_bounds = array<i64: 2, 1>, scalar_prefetch = 0 : i64, scratch_operands = 0 : i64, tpu.core_type = #tpu.core_type<tc>, window_params = [{transform_indices = @transform_0, window_bounds = array<i64: 1, 4, 256>}, {transform_indices = @transform_1, window_bounds = array<i64: 1, 1, 256>}, {transform_indices = @transform_2, window_bounds = array<i64: 1, 1, 256>}, {transform_indices = @transform_3, window_bounds = array<i64: 1, 1, 256>}]} {
    %c0_i32 = arith.constant 0 : i32
    %0 = arith.cmpi eq, %arg1, %c0_i32 : i32
    %1 = arith.extui %0 : i1 to i32
    %c0_i32_0 = arith.constant 0 : i32
    %2 = arith.cmpi ne, %1, %c0_i32_0 : i32
    scf.if %2 {
      %cst_22 = arith.constant 0.000000e+00 : f32
      %34 = vector.broadcast %cst_22 : f32 to vector<1x1x256xf32>
      %c0_23 = arith.constant 0 : index
      %c0_24 = arith.constant 0 : index
      %c0_25 = arith.constant 0 : index
      %35 = vector.load %arg4[%c0_23, %c0_24, %c0_25] : memref<1x1x256xf32, #tpu.memory_space<vmem>>, vector<1x1x256xf32>
      tpu.vector_store %arg4[%c0_23, %c0_24, %c0_25], %34 {strides = array<i32>} : memref<1x1x256xf32, #tpu.memory_space<vmem>>, vector<1x1x256xf32>,
      %cst_26 = arith.constant 0.000000e+00 : f32
      %36 = vector.broadcast %cst_26 : f32 to vector<1x1x256xf32>
      %c0_27 = arith.constant 0 : index
      %c0_28 = arith.constant 0 : index
      %c0_29 = arith.constant 0 : index
      %37 = vector.load %arg5[%c0_27, %c0_28, %c0_29] : memref<1x1x256xf32, #tpu.memory_space<vmem>>, vector<1x1x256xf32>
      tpu.vector_store %arg5[%c0_27, %c0_28, %c0_29], %36 {strides = array<i32>} : memref<1x1x256xf32, #tpu.memory_space<vmem>>, vector<1x1x256xf32>,
    } else {
    }
    %c0 = arith.constant 0 : index
    %c0_1 = arith.constant 0 : index
    %c0_2 = arith.constant 0 : index
    %3 = vector.load %arg2[%c0, %c0_1, %c0_2] : memref<1x4x256xf32, #tpu.memory_space<vmem>>, vector<1x4x256xf32>
    %c0_3 = arith.constant 0 : index
    %c0_4 = arith.constant 0 : index
    %c0_5 = arith.constant 0 : index
    %4 = vector.load %arg3[%c0_3, %c0_4, %c0_5] : memref<1x1x256xi32, #tpu.memory_space<vmem>>, vector<1x1x256xi32>
    %5 = tpu.iota {dimensions = array<i32: 1>} : vector<1x4x256xi32>
    %6 = vector.broadcast %4 : vector<1x1x256xi32> to vector<1x4x256xi32>
    %7 = arith.cmpi eq, %5, %6 : vector<1x4x256xi32>
    %cst = arith.constant dense<0xFF800000> : vector<1x256xf32>
    %8 = vector.multi_reduction <maximumf>, %3, %cst [1] : vector<1x4x256xf32> to vector<1x256xf32>
    %9 = vector.shape_cast %8 : vector<1x256xf32> to vector<1x1x256xf32>
    %10 = vector.broadcast %9 : vector<1x1x256xf32> to vector<1x4x256xf32>
    %11 = arith.subf %3, %10 : vector<1x4x256xf32>
    %12 = math.exp %11 : vector<1x4x256xf32>
    %cst_6 = arith.constant dense<0.000000e+00> : vector<1x256xf32>
    %13 = vector.multi_reduction <add>, %12, %cst_6 [1] : vector<1x4x256xf32> to vector<1x256xf32>
    %14 = vector.shape_cast %13 : vector<1x256xf32> to vector<1x1x256xf32>
    %15 = math.log %14 : vector<1x1x256xf32>
    %16 = arith.addf %15, %9 : vector<1x1x256xf32>
    %cst_7 = arith.constant 0.000000e+00 : f32
    %17 = vector.broadcast %cst_7 : f32 to vector<1x4x256xf32>
    %18 = arith.select %7, %3, %17 : vector<1x4x256xi1>, vector<1x4x256xf32>
    %cst_8 = arith.constant dense<0.000000e+00> : vector<1x256xf32>
    %19 = vector.multi_reduction <add>, %18, %cst_8 [1] : vector<1x4x256xf32> to vector<1x256xf32>
    %20 = vector.shape_cast %19 : vector<1x256xf32> to vector<1x1x256xf32>
    %21 = arith.subf %16, %20 : vector<1x1x256xf32>
    %c-100_i32 = arith.constant -100 : i32
    %22 = vector.broadcast %c-100_i32 : i32 to vector<1x1x256xi32>
    %23 = arith.cmpi ne, %4, %22 : vector<1x1x256xi32>
    %c0_9 = arith.constant 0 : index
    %c0_10 = arith.constant 0 : index
    %c0_11 = arith.constant 0 : index
    %24 = vector.load %arg4[%c0_9, %c0_10, %c0_11] : memref<1x1x256xf32, #tpu.memory_space<vmem>>, vector<1x1x256xf32>
    %cst_12 = arith.constant 0.000000e+00 : f32
    %25 = vector.broadcast %cst_12 : f32 to vector<1x1x256xf32>
    %26 = arith.select %23, %21, %25 : vector<1x1x256xi1>, vector<1x1x256xf32>
    %27 = arith.addf %24, %26 : vector<1x1x256xf32>
    %c0_13 = arith.constant 0 : index
    %c0_14 = arith.constant 0 : index
    %c0_15 = arith.constant 0 : index
    %28 = vector.load %arg4[%c0_13, %c0_14, %c0_15] : memref<1x1x256xf32, #tpu.memory_space<vmem>>, vector<1x1x256xf32>
    tpu.vector_store %arg4[%c0_13, %c0_14, %c0_15], %27 {strides = array<i32>} : memref<1x1x256xf32, #tpu.memory_space<vmem>>, vector<1x1x256xf32>,
    %c0_16 = arith.constant 0 : index
    %c0_17 = arith.constant 0 : index
    %c0_18 = arith.constant 0 : index
    %29 = vector.load %arg5[%c0_16, %c0_17, %c0_18] : memref<1x1x256xf32, #tpu.memory_space<vmem>>, vector<1x1x256xf32>
    %30 = arith.extui %23 : vector<1x1x256xi1> to vector<1x1x256xi32>
    %31 = arith.sitofp %30 : vector<1x1x256xi32> to vector<1x1x256xf32>
    %32 = arith.addf %29, %31 : vector<1x1x256xf32>
    %c0_19 = arith.constant 0 : index
    %c0_20 = arith.constant 0 : index
    %c0_21 = arith.constant 0 : index
    %33 = vector.load %arg5[%c0_19, %c0_20, %c0_21] : memref<1x1x256xf32, #tpu.memory_space<vmem>>, vector<1x1x256xf32>
    tpu.vector_store %arg5[%c0_19, %c0_20, %c0_21], %32 {strides = array<i32>} : memref<1x1x256xf32, #tpu.memory_space<vmem>>, vector<1x1x256xf32>,
    return
  }
  func.func @transform_0(%arg0: i32, %arg1: i32) -> (i32, i32, i32) {
    %c0_i32 = arith.constant 0 : i32
    %c0_i32_0 = arith.constant 0 : i32
    return %arg0, %c0_i32, %arg1 : i32, i32, i32
  }
  func.func @transform_1(%arg0: i32, %arg1: i32) -> (i32, i32, i32) {
    %c0_i32 = arith.constant 0 : i32
    %c0_i32_0 = arith.constant 0 : i32
    return %arg0, %c0_i32, %arg1 : i32, i32, i32
  }
  func.func @transform_2(%arg0: i32, %arg1: i32) -> (i32, i32, i32) {
    %c0_i32 = arith.constant 0 : i32
    %c0_i32_0 = arith.constant 0 : i32
    %c0_i32_1 = arith.constant 0 : i32
    return %arg0, %c0_i32, %c0_i32_0 : i32, i32, i32
  }
  func.func @transform_3(%arg0: i32, %arg1: i32) -> (i32, i32, i32) {
    %c0_i32 = arith.constant 0 : i32
    %c0_i32_0 = arith.constant 0 : i32
    %c0_i32_1 = arith.constant 0 : i32
    return %arg0, %c0_i32, %c0_i32_0 : i32, i32, i32
  }
}

</mosaic_0001>

<llo_original>
// kernel: focal_loss_v2.1
$region0: #{focal_loss_v2.1}
  #allocation0 [shape = 'u32[]', space=smem, size = 0x4, offset = 0x4, fixed_abs, tag = 'smem constant byte address 0x4 - core index']
  #allocation1 [shape = 'u32[72,128]{1,0:T(1,128)}', space=vmem, size = 0x9000, scoped, tag = 'internal scratch']
  %s0 = inlined_call_operand.vmem [shape: f32[2,4,256], index: 0, kind: input, shape index: {}]
  %s1 = inlined_call_operand.vmem [shape: s32[2,1,256], index: 1, kind: input, shape index: {}]
  %s2 = inlined_call_operand.vmem [shape: f32[2,1,256], index: 2, kind: output, shape index: {0}]
  %s3 = inlined_call_operand.vmem [shape: f32[2,1,256], index: 3, kind: output, shape index: {1}]
  %4 = xla_tuple %s2, %s3
  %s5 = sld [smem:[#allocation0]]
  $region53: #{focal_loss_v2.1} parent=0
    _
  %s7 = ssub.s32 1, %s5
  %s8 = scalar_select 0, %s7, %s5
  loop: start=0, step=1, limit=4
  $region2: #{focal_loss_v2.1} parent=0 // loop_pre_header
    _
  $region3: #{focal_loss_v2.1} parent=0 // loop_header
    %s10 = sphi 0, %s14
    %p11 = scmp.ge.s32.totalorder %s10, 4
    %s17 = sphi 0, %s29
    %s18 = sphi 0, %s25
    %s19 = sphi 0, %s17
    %s20 = sphi 0, %s18
    %s21 = sphi 0, %s19
    %s22 = sphi 0, %s20
    %s34 = sphi 0, %s36
    %s37 = sphi 0, %s34
    %s38 = sphi 0, %s37
    %s54 = sphi 0, %s38
    %s62 = sphi 0, %s64
    %s65 = sphi 0, %s62
    %s66 = sphi 0, %s65
    %s82 = sphi 0, %s66
    %s88 = sphi 0, %s90
    %s91 = sphi 0, %s88
    %s92 = sphi 0, %s91
    %s108 = sphi 0, %s92
    %s114 = sphi 0, %s116
    %s117 = sphi 0, %s114
    %s118 = sphi 0, %s117
    %s134 = sphi 0, %s118
  $region4: #{focal_loss_v2.1} parent=0 // loop_header_branch
    %13 = sbr.rel (%p11) target = $region8
  $region5: #{focal_loss_v2.1} parent=0 // loop_body
    %s15 = ssub.s32 %s10, 1
    %s16 = ssub.s32 %s10, 2
    %s23 = sadd.s32 1, %s18
    %p24 = scmp.ge.s32.totalorder %s23, 1
    %s25 = scalar_select %p24, 0, %s23
    %s26 = sadd.s32 1, %s17
    %s27 = scalar_select %p24, %s26, %s17
    %p28 = scmp.ge.s32.totalorder %s27, 2
    %s29 = scalar_select %p28, 0, %s27
    %s30 = ssub.s32 %s17, %s29
    %s31 = ssub.s32 %s18, %s25
    %s32 = sor.u32 %s30, %s31
    %p33 = scmp.eq.s32.totalorder %s32, 0
    %s35 = sadd.s32 %s34, 1
    %s36 = scalar_select %p33, %s34, %s35
    %p39 = pneg %p33
    %p40 = scmp.eq.s32.totalorder %s10, 1
    %p41 = por %p39, %p40
    %p42 = scmp.ne.s32.totalorder %s34, %s37
    %p43 = scmp.eq.s32.totalorder %s10, 0
    %p44 = por %p42, %p43
    %p45 = scmp.ne.s32.totalorder %s34, %s37
    %p46 = scmp.eq.s32.totalorder %s15, 1
    %p47 = por %p45, %p46
    %p48 = scmp.ne.s32.totalorder %s37, %s38
    %p49 = scmp.eq.s32.totalorder %s15, 0
    %p50 = por %p48, %p49
    %p51 = scmp.ne.s32.totalorder %s37, %s38
    %p52 = scmp.eq.s32.totalorder %s16, 1
    %p53 = por %p51, %p52
    %p55 = scmp.ne.s32.totalorder %s38, %s54
    %p56 = scmp.eq.s32.totalorder %s16, 0
    %p57 = por %p55, %p56
    %s58 = ssub.s32 %s17, %s29
    %s59 = ssub.s32 %s18, %s25
    %s60 = sor.u32 %s58, %s59
    %p61 = scmp.eq.s32.totalorder %s60, 0
    %s63 = sadd.s32 %s62, 1
    %s64 = scalar_select %p61, %s62, %s63
    %p67 = pneg %p61
    %p68 = scmp.eq.s32.totalorder %s10, 1
    %p69 = por %p67, %p68
    %p70 = scmp.ne.s32.totalorder %s62, %s65
    %p71 = scmp.eq.s32.totalorder %s10, 0
    %p72 = por %p70, %p71
    %p73 = scmp.ne.s32.totalorder %s62, %s65
    %p74 = scmp.eq.s32.totalorder %s15, 1
    %p75 = por %p73, %p74
    %p76 = scmp.ne.s32.totalorder %s65, %s66
    %p77 = scmp.eq.s32.totalorder %s15, 0
    %p78 = por %p76, %p77
    %p79 = scmp.ne.s32.totalorder %s65, %s66
    %p80 = scmp.eq.s32.totalorder %s16, 1
    %p81 = por %p79, %p80
    %p83 = scmp.ne.s32.totalorder %s66, %s82
    %p84 = scmp.eq.s32.totalorder %s16, 0
    %p85 = por %p83, %p84
    %s86 = ssub.s32 %s17, %s29
    %p87 = scmp.eq.s32.totalorder %s86, 0
    %s89 = sadd.s32 %s88, 1
    %s90 = scalar_select %p87, %s88, %s89
    %p93 = pneg %p87
    %p94 = scmp.eq.s32.totalorder %s10, 1
    %p95 = por %p93, %p94
    %p96 = scmp.ne.s32.totalorder %s88, %s91
    %p97 = scmp.eq.s32.totalorder %s10, 0
    %p98 = por %p96, %p97
    %p99 = scmp.ne.s32.totalorder %s88, %s91
    %p100 = scmp.eq.s32.totalorder %s15, 1
    %p101 = por %p99, %p100
    %p102 = scmp.ne.s32.totalorder %s91, %s92
    %p103 = scmp.eq.s32.totalorder %s15, 0
    %p104 = por %p102, %p103
    %p105 = scmp.ne.s32.totalorder %s91, %s92
    %p106 = scmp.eq.s32.totalorder %s16, 1
    %p107 = por %p105, %p106
    %p109 = scmp.ne.s32.totalorder %s92, %s108
    %p110 = scmp.eq.s32.totalorder %s16, 0
    %p111 = por %p109, %p110
    %s112 = ssub.s32 %s17, %s29
    %p113 = scmp.eq.s32.totalorder %s112, 0
    %s115 = sadd.s32 %s114, 1
    %s116 = scalar_select %p113, %s114, %s115
    %p119 = pneg %p113
    %p120 = scmp.eq.s32.totalorder %s10, 1
    %p121 = por %p119, %p120
    %p122 = scmp.ne.s32.totalorder %s114, %s117
    %p123 = scmp.eq.s32.totalorder %s10, 0
    %p124 = por %p122, %p123
    %p125 = scmp.ne.s32.totalorder %s114, %s117
    %p126 = scmp.eq.s32.totalorder %s15, 1
    %p127 = por %p125, %p126
    %p128 = scmp.ne.s32.totalorder %s117, %s118
    %p129 = scmp.eq.s32.totalorder %s15, 0
    %p130 = por %p128, %p129
    %p131 = scmp.ne.s32.totalorder %s117, %s118
    %p132 = scmp.eq.s32.totalorder %s16, 1
    %p133 = por %p131, %p132
    %p135 = scmp.ne.s32.totalorder %s118, %s134
    %p136 = scmp.eq.s32.totalorder %s16, 0
    %p137 = por %p135, %p136
    %p138 = scmp.le.s32.totalorder 1, %s10
    %p139 = scmp.lt.s32.totalorder %s10, 3
    %p140 = pnand %p138, %p139
    %p141 = pneg %p140
    // Predicated region
    $region9: #{focal_loss_v2.1} parent=5 // pred_check
      _
    $region10: #{focal_loss_v2.1} parent=5 // pred_check_branch
      %143 = sbr.rel (%p140) target = $region12
    $region11: #{focal_loss_v2.1} parent=5 // pred_region
      %s144 = ssub.s32 %s10, 1
    $region12: #{focal_loss_v2.1} parent=5 // pred_fallthru
      _
    %p145 = scmp.lt.s32.totalorder %s10, 2
    // Predicated region
    $region13: #{focal_loss_v2.1} parent=5 // pred_check
      %p146 = pneg %p145
    $region14: #{focal_loss_v2.1} parent=5 // pred_check_branch
      %148 = sbr.rel (%p146) target = $region16
    $region15: #{focal_loss_v2.1} parent=5 // pred_region
      // Predicated region
      $region17: #{focal_loss_v2.1} parent=15 // pred_check
        %p149 = pneg %p44
      $region18: #{focal_loss_v2.1} parent=15 // pred_check_branch
        %151 = sbr.rel (%p149) target = $region20
      $region19: #{focal_loss_v2.1} parent=15 // pred_region
        %s152 = smul.u32 2, %s18
        %p153 = scmp.lt.s32.totalorder %s17, 1
        %s154 = scalar_select %p153, %s17, 1
        %p155 = scmp.lt.s32.totalorder %s152, 1
        %s156 = scalar_select %p155, %s152, 1
        %s157 = smul.addr %s154, 2
        %s158 = sadd.s32 %s156, %s157
        %s159 = smul.addr %s158, 4
        %s160 = scalar_lea.vmem %s0, %s159
        %s161 = smul.u32 2, %s18
      $region20: #{focal_loss_v2.1} parent=15 // pred_fallthru
        _
      // Predicated region
      $region21: #{focal_loss_v2.1} parent=15 // pred_check
        %p162 = pneg %p72
      $region22: #{focal_loss_v2.1} parent=15 // pred_check_branch
        %164 = sbr.rel (%p162) target = $region24
      $region23: #{focal_loss_v2.1} parent=15 // pred_region
        %s165 = smul.u32 2, %s18
        %p166 = scmp.lt.s32.totalorder %s17, 1
        %s167 = scalar_select %p166, %s17, 1
        %p168 = scmp.lt.s32.totalorder %s165, 1
        %s169 = scalar_select %p168, %s165, 1
        %s170 = smul.addr %s167, 2
        %s171 = sadd.s32 %s169, %s170
        %s172 = scalar_lea.vmem %s1, %s171
        %s173 = smul.u32 2, %s18
      $region24: #{focal_loss_v2.1} parent=15 // pred_fallthru
        _
    $region16: #{focal_loss_v2.1} parent=5 // pred_fallthru
      _
    %p174 = scmp.le.s32.totalorder 1, %s10
    %p175 = scmp.lt.s32.totalorder %s10, 3
    %p176 = pnand %p174, %p175
    %p177 = pneg %p176
    // Predicated region
    $region25: #{focal_loss_v2.1} parent=5 // pred_check
      _
    $region26: #{focal_loss_v2.1} parent=5 // pred_check_branch
      %179 = sbr.rel (%p176) target = $region28
    $region27: #{focal_loss_v2.1} parent=5 // pred_region
      %s180 = ssub.s32 %s10, 1
      %s181 = smul.u32 2, %s20
      %p182 = scmp.lt.s32.totalorder %s19, 1
      %s183 = scalar_select %p182, %s19, 1
      %p184 = scmp.lt.s32.totalorder %s181, 1
      %s185 = scalar_select %p184, %s181, 1
      %s186 = smul.addr %s183, 2
      %s187 = sadd.s32 %s185, %s186
      %s188 = smul.addr %s187, 4
      %s189 = scalar_lea.vmem %s0, %s188
      %p190 = pneg %p50
      %p191 = pneg %p47
      %s192 = smul.u32 2, %s20
      %p193 = scmp.lt.s32.totalorder %s19, 1
      %s194 = scalar_select %p193, %s19, 1
      %p195 = scmp.lt.s32.totalorder %s192, 1
      %s196 = scalar_select %p195, %s192, 1
      %s197 = smul.addr %s194, 2
      %s198 = sadd.s32 %s196, %s197
      %s199 = scalar_lea.vmem %s1, %s198
      %p200 = pneg %p78
      %p201 = pneg %p75
      %p202 = pneg %p104
      %p203 = pneg %p101
      %p204 = scmp.lt.s32.totalorder %s19, 1
      %s205 = scalar_select %p204, %s19, 1
      %s206 = smul.addr %s205, 2
      %s207 = scalar_lea.vmem %s2, %s206
      %p208 = pneg %p130
      %p209 = pneg %p127
      %p210 = scmp.lt.s32.totalorder %s19, 1
      %s211 = scalar_select %p210, %s19, 1
      %s212 = smul.addr %s211, 2
      %s213 = scalar_lea.vmem %s3, %s212
      %s214 = smul.u32 2, %s20
      %p215 = scmp.lt.s32.totalorder %s19, 1
      %s216 = scalar_select %p215, %s19, 1
      %p217 = scmp.lt.s32.totalorder %s214, 1
      %s218 = scalar_select %p217, %s214, 1
      %s219 = smul.addr %s216, 2
      %s220 = sadd.s32 %s218, %s219
      %s221 = smul.addr %s220, 4
      %s222 = scalar_lea.vmem %s0, %s221
      %s223 = smul.u32 2, %s20
      %s224 = smul.u32 2, %s20
      %p225 = scmp.lt.s32.totalorder %s19, 1
      %s226 = scalar_select %p225, %s19, 1
      %p227 = scmp.lt.s32.totalorder %s224, 1
      %s228 = scalar_select %p227, %s224, 1
      %s229 = smul.addr %s226, 2
      %s230 = sadd.s32 %s228, %s229
      %s231 = scalar_lea.vmem %s1, %s230
      %s232 = smul.u32 2, %s20
      %p233 = scmp.lt.s32.totalorder %s19, 1
      %s234 = scalar_select %p233, %s19, 1
      %s235 = smul.addr %s234, 2
      %s236 = scalar_lea.vmem %s2, %s235
      %p237 = scmp.lt.s32.totalorder %s19, 1
      %s238 = scalar_select %p237, %s19, 1
      %s239 = smul.addr %s238, 2
      %s240 = scalar_lea.vmem %s3, %s239
      %p241 = scmp.eq.s32.totalorder %s20, 0
      // Predicated region
      $region29: #{focal_loss_v2.1} parent=27 // pred_check
        %p242 = pneg %p241
      $region30: #{focal_loss_v2.1} parent=27 // pred_check_branch
        %244 = sbr.rel (%p242) target = $region32
      $region31: #{focal_loss_v2.1} parent=27 // pred_region
        %v245 = vlaneseq
        %vm246 = vcmp.ge.s32.totalorder %v245, 0
        %vm247 = vcmp.lt.s32.totalorder %v245, 256
        %vm248 = vmand %vm246, %vm247
        %249 = vst.msk [vmem:[%s236] sm:$0x3] %vm248, 0.0
        %250 = vst.msk [vmem:[%s240] sm:$0x3] %vm248, 0.0
      $region32: #{focal_loss_v2.1} parent=27 // pred_fallthru
        _
      %v251 = vld [vmem:[%s222] sm:$0xff]
      %v252 = vld [vmem:[%s231] sm:$0x3]
      %v253 = vlaneseq
      %v254 = vshrl.u32 %v253, 7
      %v255 = vperm.slane %v252, 0
      %v256 = vperm.slane %v252, 1
      %vm257 = vcmp.eq.s32.totalorder %v254, %v255
      %vm258 = vcmp.eq.s32.totalorder %v254, %v256
      %260 = vst [vmem:[#allocation1] ss:$2 sm:$0xff] %v251
      %v261 = vld.sshfl [vmem:[#allocation1] sm:$0xff pattern:$0x75316420]
      %v262 = vld.sshfl [vmem:[#allocation1 + $0x8] sm:$0xff pattern:$0x75316420]
      %vm265 = vcmask 1043456
      %v266 = vsel %vm265, %v261, -inf
      %v267 = vrot.slane %v266, 4
      %v268 = vmax.f32 %v266, %v267
      %v269 = vrot.slane %v268, 2
      %v270 = vmax.f32 %v268, %v269
      %v271 = vrot.slane %v270, 1
      %v272 = vmax.f32 %v270, %v271
      %v273 = vsel %vm265, %v262, -inf
      %v274 = vrot.slane %v273, 4
      %v275 = vmax.f32 %v273, %v274
      %v276 = vrot.slane %v275, 2
      %v277 = vmax.f32 %v275, %v276
      %v278 = vrot.slane %v277, 1
      %v279 = vmax.f32 %v277, %v278
      %v282 = vrot.slane %v279, 4
      %v283 = vsel %vm265, %v272, %v282
      %v285 = vsub.f32 %v251, %v283
      %v286 = vmul.f32 %v285, 1.442695
      %v287 = vpow.pop %v286
      %289 = vst [vmem:[#allocation1] ss:$2 sm:$0xff] %v287
      %v290 = vld.sshfl [vmem:[#allocation1] sm:$0xff pattern:$0x75316420]
      %v291 = vld.sshfl [vmem:[#allocation1 + $0x8] sm:$0xff pattern:$0x75316420]
      %v294 = vsel %vm265, %v290, 0.0
      %v295 = vrot.slane %v294, 4
      %v296 = vadd.f32 %v294, %v295
      %v297 = vrot.slane %v296, 2
      %v298 = vadd.f32 %v296, %v297
      %v299 = vrot.slane %v298, 1
      %v300 = vadd.f32 %v298, %v299
      %v301 = vsel %vm265, %v291, 0.0
      %v302 = vrot.slane %v301, 4
      %v303 = vadd.f32 %v301, %v302
      %v304 = vrot.slane %v303, 2
      %v305 = vadd.f32 %v303, %v304
      %v306 = vrot.slane %v305, 1
      %v307 = vadd.f32 %v305, %v306
      %v308 = vlog2.pop %v300
      %v309 = vmul.f32 %v308, 0.6931472
      %v310 = vlog2.pop %v307
      %v311 = vmul.f32 %v310, 0.6931472
      %v312 = vadd.f32 %v309, %v272
      %v313 = vadd.f32 %v311, %v279
      %314 = vst [vmem:[#allocation1] ss:$2 sm:$0xff] %v251
      %v315 = vld.sshfl [vmem:[#allocation1] sm:$0xff pattern:$0x75316420]
      %v316 = vld.sshfl [vmem:[#allocation1 + $0x8] sm:$0xff pattern:$0x75316420]
      %v319 = vsel %vm257, %v315, 0.0
      %v320 = vsel %vm258, %v316, 0.0
      %v321 = vsel %vm265, %v319, 0.0
      %v322 = vrot.slane %v321, 4
      %v323 = vadd.f32 %v321, %v322
      %v324 = vrot.slane %v323, 2
      %v325 = vadd.f32 %v323, %v324
      %v326 = vrot.slane %v325, 1
      %v327 = vadd.f32 %v325, %v326
      %v328 = vsel %vm265, %v320, 0.0
      %v329 = vrot.slane %v328, 4
      %v330 = vadd.f32 %v328, %v329
      %v331 = vrot.slane %v330, 2
      %v332 = vadd.f32 %v330, %v331
      %v333 = vrot.slane %v332, 1
      %v334 = vadd.f32 %v332, %v333
      %v335 = vsub.f32 %v312, %v327
      %v336 = vsub.f32 %v313, %v334
      %vm337 = vcmp.ne.s32.totalorder %v252, 4294967196
      %v338 = vld [vmem:[%s236] sm:$0x3]
      %v341 = vrot.slane %v336, 7
      %vm342 = vcmask 1040384
      %v343 = vsel %vm342, %v335, %v341
      %v345 = vsel %vm337, %v343, 0.0
      %v346 = vadd.f32 %v338, %v345
      %v347 = vlaneseq
      %vm348 = vcmp.ge.s32.totalorder %v347, 0
      %vm349 = vcmp.lt.s32.totalorder %v347, 256
      %vm350 = vmand %vm348, %vm349
      %351 = vst.msk [vmem:[%s236] sm:$0x3] %vm350, %v346
      %v352 = vld [vmem:[%s240] sm:$0x3]
      %v353 = vsel %vm337, 1, 0
      %v354 = vcvt.s32.f32 %v353
      %v355 = vadd.f32 %v352, %v354
      %356 = vst.msk [vmem:[%s240] sm:$0x3] %vm350, %v355
      %p357 = scmp.lt.s32.totalorder %s19, 1
      %s358 = scalar_select %p357, %s19, 1
      %s359 = smul.addr %s358, 2
      %s360 = scalar_lea.vmem %s2, %s359
      %p361 = scmp.lt.s32.totalorder %s19, 1
      %s362 = scalar_select %p361, %s19, 1
      %s363 = smul.addr %s362, 2
      %s364 = scalar_lea.vmem %s3, %s363
      // Predicated region
      $region33: #{focal_loss_v2.1} parent=27 // pred_check
        %p365 = pneg %p101
      $region34: #{focal_loss_v2.1} parent=27 // pred_check_branch
        %367 = sbr.rel (%p365) target = $region36
      $region35: #{focal_loss_v2.1} parent=27 // pred_region
        _
      $region36: #{focal_loss_v2.1} parent=27 // pred_fallthru
        _
      // Predicated region
      $region37: #{focal_loss_v2.1} parent=27 // pred_check
        %p368 = pneg %p127
      $region38: #{focal_loss_v2.1} parent=27 // pred_check_branch
        %370 = sbr.rel (%p368) target = $region40
      $region39: #{focal_loss_v2.1} parent=27 // pred_region
        _
      $region40: #{focal_loss_v2.1} parent=27 // pred_fallthru
        _
    $region28: #{focal_loss_v2.1} parent=5 // pred_fallthru
      _
    %p371 = scmp.le.s32.totalorder 2, %s10
    // Predicated region
    $region41: #{focal_loss_v2.1} parent=5 // pred_check
      %p372 = pneg %p371
    $region42: #{focal_loss_v2.1} parent=5 // pred_check_branch
      %374 = sbr.rel (%p372) target = $region44
    $region43: #{focal_loss_v2.1} parent=5 // pred_region
      %s375 = ssub.s32 %s10, 2
      // Predicated region
      $region45: #{focal_loss_v2.1} parent=43 // pred_check
        %p376 = pneg %p107
      $region46: #{focal_loss_v2.1} parent=43 // pred_check_branch
        %378 = sbr.rel (%p376) target = $region48
      $region47: #{focal_loss_v2.1} parent=43 // pred_region
        %p379 = scmp.lt.s32.totalorder %s21, 1
        %s380 = scalar_select %p379, %s21, 1
        %s381 = smul.addr %s380, 2
        %s382 = scalar_lea.vmem %s2, %s381
      $region48: #{focal_loss_v2.1} parent=43 // pred_fallthru
        _
      // Predicated region
      $region49: #{focal_loss_v2.1} parent=43 // pred_check
        %p383 = pneg %p133
      $region50: #{focal_loss_v2.1} parent=43 // pred_check_branch
        %385 = sbr.rel (%p383) target = $region52
      $region51: #{focal_loss_v2.1} parent=43 // pred_region
        %p386 = scmp.lt.s32.totalorder %s21, 1
        %s387 = scalar_select %p386, %s21, 1
        %s388 = smul.addr %s387, 2
        %s389 = scalar_lea.vmem %s3, %s388
      $region52: #{focal_loss_v2.1} parent=43 // pred_fallthru
        _
    $region44: #{focal_loss_v2.1} parent=5 // pred_fallthru
      _
  $region6: #{focal_loss_v2.1} parent=0 // loop_footer
    %s14 = sadd.s32 1, %s10
  $region7: #{focal_loss_v2.1} parent=0 // loop_footer_branch
    %9 = sbr.rel target = $region3
  $region8: #{focal_loss_v2.1} parent=0 // loop_exit
    _

</llo_original>
